<compile_context>
chip_gen: v6e
topology: v6e:2x2x1
jax: 0.10.0
libtpu: 0.0.40
codegen_flags: <defaults>
</compile_context>

<pallas_src>
import functools

import jax
import jax.numpy as jnp
from jax.experimental import pallas as pl
from jax.experimental.pallas import tpu as pltpu


# ---------------------------------------------------------------------------
# Shared in-kernel math
# ---------------------------------------------------------------------------
def _transd_distances(sp_e, sp_t, tp_e, tp_t, sn_e, sn_t, tn_e, tn_t,
                      r_emb, r_trf, norm_p):
    def transfer(e, e_trf):
        # e = e + sum(e * e_transfer, -1, keepdim=True) * r_transfer
        e2 = e + jnp.sum(e * e_trf, axis=-1, keepdims=True) * r_trf
        # F.normalize(p=2, dim=-1, eps=1e-12): clamp sum-of-squares at eps^2 and
        # use a fused rsqrt (EUP slot) instead of sqrt + divide (VPU).
        ss = jnp.sum(e2 * e2, axis=-1, keepdims=True)
        return e2 * jax.lax.rsqrt(jnp.maximum(ss, 1e-24))

    def distance(s_e, s_trf, t_e, t_trf):
        d = transfer(s_e, s_trf) + r_emb - transfer(t_e, t_trf)
        if norm_p == 1:
            return jnp.sum(jnp.abs(d), axis=-1, keepdims=True)       # [block_b, 1]
        return jnp.sqrt(jnp.sum(d * d, axis=-1, keepdims=True))      # [block_b, 1]

    pos = distance(sp_e, sp_t, tp_e, tp_t)
    neg = distance(sn_e, sn_t, tn_e, tn_t)
    return pos, neg


def _masked_margin_loss(pos, neg, margin, true_b, block_b, out_ref):
    # MarginRankingLoss(target=-1, reduction='none'): max(0, pos - neg + margin)
    per_sample = jnp.maximum(pos - neg + margin, 0.0)                 # [block_b, 1]
    # Mask batch-padding rows (padded indices point at real rows, so they would
    # otherwise contribute max(0, margin)).  NOTE: keep this mask AFTER the loss.
    row = (pl.program_id(0) * block_b
           + jax.lax.broadcasted_iota(jnp.int32, (block_b, 1), 0))
    per_sample = jnp.where(row < true_b, per_sample, 0.0)
    # Lane-dense (8,128) partial-sum tile; final reduce + /true_B in the wrapper.
    out_ref[...] = jnp.zeros((8, 128), jnp.float32) + jnp.sum(per_sample)


# ---------------------------------------------------------------------------
# Main kernel: node + link tables resident in VMEM, in-kernel one-hot gather
# ---------------------------------------------------------------------------
def _transd_resident_kernel(bsz_ref, margin_ref, idx_ref, node_ref, link_ref,
                            out_ref, *, norm_p):
    """idx_ref  : [block_b, 8] int32 VMEM  (cols: sp, tp, sn, tn, r, pad, pad, pad)
       node_ref : [N_pad, 2*dim] f32 VMEM resident  [node_emb | node_transfer]
       link_ref : [L_pad, 2*dim] f32 VMEM resident  [link_emb | link_transfer]
       bsz_ref / margin_ref : (1,) SMEM scalars (true batch size, margin)
       out_ref  : [8, 128] f32 partial-sum tile for this block."""
    block_b = idx_ref.shape[0]
    n_pad = node_ref.shape[0]
    l_pad = link_ref.shape[0]
    dim = link_ref.shape[1] // 2

    node_tbl = node_ref[...]
    link_tbl = link_ref[...]

    node_iota = jax.lax.broadcasted_iota(jnp.int32, (block_b, n_pad), 1)
    link_iota = jax.lax.broadcasted_iota(jnp.int32, (block_b, l_pad), 1)

    def gather(col, iota, tbl):
        # one-hot(idx[:, col]) @ resident [emb | transfer] table on the (idle) MXU.
        onehot = (idx_ref[:, col:col + 1] == iota).astype(jnp.float32)
        cat = jnp.dot(onehot, tbl, preferred_element_type=jnp.float32)
        return cat[:, :dim], cat[:, dim:]

    # TODO(synk): if N_pad/L_pad ever grow past ~2k, the O(block_b * N_pad) one-hot
    # should be replaced by a row-gather DMA (or jnp.take on the resident table).
    sp_e, sp_t = gather(0, node_iota, node_tbl)
    tp_e, tp_t = gather(1, node_iota, node_tbl)
    sn_e, sn_t = gather(2, node_iota, node_tbl)
    tn_e, tn_t = gather(3, node_iota, node_tbl)
    r_emb, r_trf = gather(4, link_iota, link_tbl)

    pos, neg = _transd_distances(sp_e, sp_t, tp_e, tp_t, sn_e, sn_t, tn_e, tn_t,
                                 r_emb, r_trf, norm_p)
    _masked_margin_loss(pos, neg, margin_ref[0], bsz_ref[0], block_b, out_ref)


# ---------------------------------------------------------------------------
# Fallback kernel (node table too big for VMEM): pre-gathered rows streamed in
# ---------------------------------------------------------------------------
def _transd_streamed_kernel(bsz_ref, margin_ref, nodes_ref, r_ref, link_ref,
                            out_ref, *, norm_p):
    """nodes_ref: [8, block_b, dim] (sp_e, tp_e, sn_e, tn_e, sp_t, tp_t, sn_t, tn_t)
       r_ref    : [block_b, 1] int32 relation ids
       link_ref : [L_pad, 2*dim] resident fused link tables."""
    block_b = nodes_ref.shape[1]
    l_pad = link_ref.shape[0]
    dim = link_ref.shape[1] // 2

    sp_e, tp_e, sn_e, tn_e = nodes_ref[0], nodes_ref[1], nodes_ref[2], nodes_ref[3]
    sp_t, tp_t, sn_t, tn_t = nodes_ref[4], nodes_ref[5], nodes_ref[6], nodes_ref[7]

    link_iota = jax.lax.broadcasted_iota(jnp.int32, (block_b, l_pad), 1)
    onehot = (r_ref[...] == link_iota).astype(jnp.float32)
    cat = jnp.dot(onehot, link_ref[...], preferred_element_type=jnp.float32)
    r_emb, r_trf = cat[:, :dim], cat[:, dim:]

    pos, neg = _transd_distances(sp_e, sp_t, tp_e, tp_t, sn_e, sn_t, tn_e, tn_t,
                                 r_emb, r_trf, norm_p)
    _masked_margin_loss(pos, neg, margin_ref[0], bsz_ref[0], block_b, out_ref)


# ---------------------------------------------------------------------------
# Wrapper
# ---------------------------------------------------------------------------
def _round_up(x, m):
    return (x + m - 1) // m * m


def _tpu_vmem_budget():
    """Returns (tile budget bytes, vmem_limit_bytes), sized per TPU generation."""
    cap = 0
    try:
        cap = int(getattr(pltpu.get_tpu_info(), "vmem_capacity_bytes", 0) or 0)
    except Exception:
        cap = 0
    if cap >= 96 * 1024 * 1024:
        # v5e / v6e: 128 MiB physical VMEM -> large tiles amortize the ~0.35us/step
        # pipeline overhead; scoped limit raised well past the 16/32 MiB defaults.
        return 64 * 1024 * 1024, 96 * 1024 * 1024
    # v7x (64 MiB per TensorCore) or unknown: keep total footprint <= ~48 MiB so
    # double-buffering stays intact.
    return 24 * 1024 * 1024, 48 * 1024 * 1024


def _choose_block_b(batch, per_row_bytes, tile_budget_bytes, reserved_bytes):
    avail = max(tile_budget_bytes - reserved_bytes, 2 * 1024 * 1024)
    bb = avail // (2 * per_row_bytes)          # 2x: double-buffering / live copies
    bb = max(8, min(int(bb), 8192))
    bb = (bb // 8) * 8
    b_pad8 = _round_up(batch, 8)
    bb = min(bb, b_pad8)
    # Keep >= 2 grid blocks when the batch allows it so dimension_semantics
    # ("parallel",) can shard the grid across both TensorCores on v7x.
    if b_pad8 >= 16:
        bb = min(bb, _round_up(b_pad8 // 2, 8))
    return max(8, (bb // 8) * 8)


def transd_forward(node_emb, link_emb, node_transfer, link_transfer,
                   sp, tp, sn, tn, r, *, norm_p=2, margin=1.0,
                   block_b=None, force_streamed=False):
    """JAX/Pallas equivalent of TransD.forward(sp, tp, sn, tn, r)."""
    batch = int(sp.shape[0])
    node_size, dim = node_emb.shape
    link_size = link_emb.shape[0]

    n_pad = _round_up(node_size, 8)
    l_pad = _round_up(link_size, 8)
    lane_dim = _round_up(dim, 128)             # f32 lane padding for narrow dims

    tile_budget, vmem_limit = _tpu_vmem_budget()
    node_bytes = n_pad * 2 * dim * 4
    link_bytes = l_pad * 2 * dim * 4

    # In-kernel gather (resident tables) whenever the node table fits comfortably.
    use_resident = (not force_streamed
                    and node_bytes <= 4 * 1024 * 1024
                    and n_pad <= 2048 and l_pad <= 2048)

    if use_resident:
        per_row = 4 * (2 * n_pad + l_pad + 24 * lane_dim) + 1024
        reserved = 2 * (node_bytes + link_bytes) + (1 << 20)
    else:
        per_row = 4 * (24 * lane_dim + l_pad) + 512
        reserved = 2 * link_bytes + (1 << 20)

    if block_b is None:
        block_b = _choose_block_b(batch, per_row, tile_budget, reserved)
    block_b = max(8, (int(block_b) // 8) * 8)
    b_pad = _round_up(batch, block_b)
    nb = b_pad // block_b

    def pad_idx(ix):
        return jnp.pad(ix.astype(jnp.int32), (0, b_pad - batch))

    # Fused relation tables [link_emb | link_transfer], resident in VMEM.
    link_cat = jnp.pad(
        jnp.concatenate([link_emb, link_transfer], axis=-1).astype(jnp.float32),
        ((0, l_pad - link_size), (0, 0)))

    # Dynamic scalars in SMEM: avoids a Mosaic recompile per batch size / margin.
    true_b_arr = jnp.array([batch], dtype=jnp.int32)
    margin_arr = jnp.array([float(margin)], dtype=jnp.float32)

    cparams = pltpu.CompilerParams(
        dimension_semantics=("parallel",),
        vmem_limit_bytes=vmem_limit,
    )

    if use_resident:
        node_cat = jnp.pad(
            jnp.concatenate([node_emb, node_transfer], axis=-1).astype(jnp.float32),
            ((0, n_pad - node_size), (0, 0)))
        # Single [B_pad, 8] int32 index stream (sp, tp, sn, tn, r, pad, pad, pad).
        idx = jnp.stack([pad_idx(sp), pad_idx(tp), pad_idx(sn), pad_idx(tn),
                         pad_idx(r)], axis=1)
        idx = jnp.pad(idx, ((0, 0), (0, 3)))

        partial_sums = pl.pallas_call(
            functools.partial(_transd_resident_kernel, norm_p=norm_p),
            out_shape=jax.ShapeDtypeStruct((nb * 8, 128), jnp.float32),
            grid=(nb,),
            in_specs=[
                pl.BlockSpec(memory_space=pltpu.MemorySpace.SMEM),      # true batch
                pl.BlockSpec(memory_space=pltpu.MemorySpace.SMEM),      # margin
                pl.BlockSpec((block_b, 8), lambda i: (i, 0)),           # indices
                pl.BlockSpec((n_pad, 2 * dim), lambda i: (0, 0)),       # node tables
                pl.BlockSpec((l_pad, 2 * dim), lambda i: (0, 0)),       # link tables
            ],
            out_specs=pl.BlockSpec((8, 128), lambda i: (i, 0)),
            compiler_params=cparams,
        )(true_b_arr, margin_arr, idx, node_cat, link_cat)
    else:
        # Fallback for node tables too large for VMEM residency.
        # TODO(synk): replace this XLA gather with in-kernel per-row make_async_copy
        # gathers (memory_space=pl.ANY + scalar-prefetched indices), double-buffered
        # against compute, to avoid the extra HBM round trip.
        sp_, tp_, sn_, tn_ = pad_idx(sp), pad_idx(tp), pad_idx(sn), pad_idx(tn)
        stacked = jnp.stack(
            [node_emb[sp_], node_emb[tp_], node_emb[sn_], node_emb[tn_],
             node_transfer[sp_], node_transfer[tp_],
             node_transfer[sn_], node_transfer[tn_]], axis=0).astype(jnp.float32)
        r2 = pad_idx(r).reshape(b_pad, 1)

        partial_sums = pl.pallas_call(
            functools.partial(_transd_streamed_kernel, norm_p=norm_p),
            out_shape=jax.ShapeDtypeStruct((nb * 8, 128), jnp.float32),
            grid=(nb,),
            in_specs=[
                pl.BlockSpec(memory_space=pltpu.MemorySpace.SMEM),      # true batch
                pl.BlockSpec(memory_space=pltpu.MemorySpace.SMEM),      # margin
                pl.BlockSpec((8, block_b, dim), lambda i: (0, i, 0)),   # node rows
                pl.BlockSpec((block_b, 1), lambda i: (i, 0)),           # relation ids
                pl.BlockSpec((l_pad, 2 * dim), lambda i: (0, 0)),       # link tables
            ],
            out_specs=pl.BlockSpec((8, 128), lambda i: (i, 0)),
            compiler_params=cparams,
        )(true_b_arr, margin_arr, stacked, r2, link_cat)

    block_sums = partial_sums.reshape(nb, 8, 128)[:, 0, 0]
    return jnp.sum(block_sums) / batch


# ---------------------------------------------------------------------------
# Pure-JAX reference (mirrors the PyTorch module) for correctness checking
# ---------------------------------------------------------------------------
def _reference_forward(node_emb, link_emb, node_transfer, link_transfer,
                       sp, tp, sn, tn, r, *, norm_p=2, margin=1.0):
    def transfer(e, et, rt):
        e2 = e + jnp.sum(e * et, axis=-1, keepdims=True) * rt
        l2 = jnp.sqrt(jnp.sum(e2 * e2, axis=-1, keepdims=True))
        return e2 / jnp.maximum(l2, 1e-12)

    def dist(s, t):
        r_e, r_t = link_emb[r], link_transfer[r]
        s_e = transfer(node_emb[s], node_transfer[s], r_t)
        t_e = transfer(node_emb[t], node_transfer[t], r_t)
        d = s_e + r_e - t_e
        if norm_p == 1:
            return jnp.sum(jnp.abs(d), axis=-1)
        return jnp.sqrt(jnp.sum(d * d, axis=-1))

    pos, neg = dist(sp, tp), dist(sn, tn)
    return jnp.mean(jnp.maximum(pos - neg + margin, 0.0))


if __name__ == "__main__":
    # Small, deterministic synthetic setup consistent with the module's __init__.
    node_size, link_size, dim = 50, 10, 32
    margin = 1.0

    key = jax.random.PRNGKey(0)
    k1, k2, k3, k4, kidx = jax.random.split(key, 5)

    uniform_range = 6.0 / (dim ** 0.5)
    init = lambda k, n: jax.random.uniform(
        k, (n, dim), jnp.float32, -uniform_range, uniform_range)

    node_emb = init(k1, node_size)
    link_emb = init(k2, link_size)
    node_transfer = init(k3, node_size)
    link_transfer = init(k4, link_size)

    configs = [
        dict(batch=13, norm_p=2, block_b=8, force_streamed=False),     # mask + 2 blocks
        dict(batch=13, norm_p=1, block_b=8, force_streamed=False),     # L1 distance
        dict(batch=64, norm_p=2, block_b=None, force_streamed=False),  # auto block size
        dict(batch=13, norm_p=2, block_b=8, force_streamed=True),      # large-table fallback
    ]

    ok = True
    for cfg in configs:
        batch = cfg["batch"]
        ks = jax.random.split(jax.random.fold_in(kidx, batch), 5)
        sp = jax.random.randint(ks[0], (batch,), 0, node_size)
        tp = jax.random.randint(ks[1], (batch,), 0, node_size)
        sn = jax.random.randint(ks[2], (batch,), 0, node_size)
        tn = jax.random.randint(ks[3], (batch,), 0, node_size)
        r = jax.random.randint(ks[4], (batch,), 0, link_size)

        loss = transd_forward(node_emb, link_emb, node_transfer, link_transfer,
                              sp, tp, sn, tn, r, norm_p=cfg["norm_p"], margin=margin,
                              block_b=cfg["block_b"],
                              force_streamed=cfg["force_streamed"])
        loss = jax.block_until_ready(loss)
        ref = _reference_forward(node_emb, link_emb, node_transfer, link_transfer,
                                 sp, tp, sn, tn, r, norm_p=cfg["norm_p"], margin=margin)
        if not jnp.allclose(loss, ref, rtol=1e-4, atol=1e-5):
            ok = False
            print("MISMATCH", cfg, float(loss), float(ref))

    assert ok
    print("KERNEL_OK")
</pallas_src>

<mosaic_0001>
module attributes {stable_mosaic.version = 11 : i64} {
  func.func @_transd_resident_kernel(%arg0: i32, %arg1: memref<1xi32, #tpu.memory_space<smem>>, %arg2: memref<1xf32, #tpu.memory_space<smem>>, %arg3: memref<8x8xi32, #tpu.memory_space<vmem>>, %arg4: memref<56x64xf32, #tpu.memory_space<vmem>>, %arg5: memref<16x64xf32, #tpu.memory_space<vmem>>, %arg6: memref<8x128xf32, #tpu.memory_space<vmem>>) attributes {dimension_semantics = [#tpu.dimension_semantics<parallel>], iteration_bounds = array<i64: 2>, scalar_prefetch = 0 : i64, scratch_operands = 0 : i64, tpu.core_type = #tpu.core_type<tc>, window_params = [{transform_indices = @transform_0, window_bounds = array<i64: 1>}, {transform_indices = @transform_1, window_bounds = array<i64: 1>}, {transform_indices = @transform_2, window_bounds = array<i64: 8, 8>}, {pipeline_mode = #tpu.pipeline_mode<synchronous>, transform_indices = @transform_3, window_bounds = array<i64: 56, 64>}, {pipeline_mode = #tpu.pipeline_mode<synchronous>, transform_indices = @transform_4, window_bounds = array<i64: 16, 64>}, {transform_indices = @transform_5, window_bounds = array<i64: 8, 128>}]} {
    %c0 = arith.constant 0 : index
    %c0_0 = arith.constant 0 : index
    %0 = vector.load %arg4[%c0, %c0_0] : memref<56x64xf32, #tpu.memory_space<vmem>>, vector<56x64xf32>
    %c0_1 = arith.constant 0 : index
    %c0_2 = arith.constant 0 : index
    %1 = vector.load %arg5[%c0_1, %c0_2] : memref<16x64xf32, #tpu.memory_space<vmem>>, vector<16x64xf32>
    %2 = tpu.iota {dimensions = array<i32: 1>} : vector<8x56xi32>
    %3 = tpu.iota {dimensions = array<i32: 1>} : vector<8x16xi32>
    %c0_3 = arith.constant 0 : index
    %c0_4 = arith.constant 0 : index
    %4 = vector.load %arg3[%c0_3, %c0_4] : memref<8x8xi32, #tpu.memory_space<vmem>>, vector<8x1xi32>
    %5 = vector.broadcast %4 : vector<8x1xi32> to vector<8x56xi32>
    %6 = arith.cmpi eq, %5, %2 : vector<8x56xi32>
    %7 = arith.extui %6 : vector<8x56xi1> to vector<8x56xi32>
    %8 = arith.sitofp %7 : vector<8x56xi32> to vector<8x56xf32>
    %cst = arith.constant dense<0.000000e+00> : vector<8x64xf32>
    %9 = tpu.matmul %8, %0, %cst {dimension_numbers = #tpu.dot_dimension_numbers<[1], [0], [0], [1], [0, 0, 1, 1], [], []>} : vector<8x56xf32>, vector<56x64xf32>, vector<8x64xf32> -> vector<8x64xf32>
    %10 = vector.extract_strided_slice %9 {offsets = [0, 0], sizes = [8, 32], strides = [1, 1]} : vector<8x64xf32> to vector<8x32xf32>
    %11 = vector.extract_strided_slice %9 {offsets = [0, 32], sizes = [8, 32], strides = [1, 1]} : vector<8x64xf32> to vector<8x32xf32>
    %c0_5 = arith.constant 0 : index
    %c1 = arith.constant 1 : index
    %12 = vector.load %arg3[%c0_5, %c1] : memref<8x8xi32, #tpu.memory_space<vmem>>, vector<8x1xi32>
    %13 = vector.broadcast %12 : vector<8x1xi32> to vector<8x56xi32>
    %14 = arith.cmpi eq, %13, %2 : vector<8x56xi32>
    %15 = arith.extui %14 : vector<8x56xi1> to vector<8x56xi32>
    %16 = arith.sitofp %15 : vector<8x56xi32> to vector<8x56xf32>
    %cst_6 = arith.constant dense<0.000000e+00> : vector<8x64xf32>
    %17 = tpu.matmul %16, %0, %cst_6 {dimension_numbers = #tpu.dot_dimension_numbers<[1], [0], [0], [1], [0, 0, 1, 1], [], []>} : vector<8x56xf32>, vector<56x64xf32>, vector<8x64xf32> -> vector<8x64xf32>
    %18 = vector.extract_strided_slice %17 {offsets = [0, 0], sizes = [8, 32], strides = [1, 1]} : vector<8x64xf32> to vector<8x32xf32>
    %19 = vector.extract_strided_slice %17 {offsets = [0, 32], sizes = [8, 32], strides = [1, 1]} : vector<8x64xf32> to vector<8x32xf32>
    %c0_7 = arith.constant 0 : index
    %c2 = arith.constant 2 : index
    %20 = vector.load %arg3[%c0_7, %c2] : memref<8x8xi32, #tpu.memory_space<vmem>>, vector<8x1xi32>
    %21 = vector.broadcast %20 : vector<8x1xi32> to vector<8x56xi32>
    %22 = arith.cmpi eq, %21, %2 : vector<8x56xi32>
    %23 = arith.extui %22 : vector<8x56xi1> to vector<8x56xi32>
    %24 = arith.sitofp %23 : vector<8x56xi32> to vector<8x56xf32>
    %cst_8 = arith.constant dense<0.000000e+00> : vector<8x64xf32>
    %25 = tpu.matmul %24, %0, %cst_8 {dimension_numbers = #tpu.dot_dimension_numbers<[1], [0], [0], [1], [0, 0, 1, 1], [], []>} : vector<8x56xf32>, vector<56x64xf32>, vector<8x64xf32> -> vector<8x64xf32>
    %26 = vector.extract_strided_slice %25 {offsets = [0, 0], sizes = [8, 32], strides = [1, 1]} : vector<8x64xf32> to vector<8x32xf32>
    %27 = vector.extract_strided_slice %25 {offsets = [0, 32], sizes = [8, 32], strides = [1, 1]} : vector<8x64xf32> to vector<8x32xf32>
    %c0_9 = arith.constant 0 : index
    %c3 = arith.constant 3 : index
    %28 = vector.load %arg3[%c0_9, %c3] : memref<8x8xi32, #tpu.memory_space<vmem>>, vector<8x1xi32>
    %29 = vector.broadcast %28 : vector<8x1xi32> to vector<8x56xi32>
    %30 = arith.cmpi eq, %29, %2 : vector<8x56xi32>
    %31 = arith.extui %30 : vector<8x56xi1> to vector<8x56xi32>
    %32 = arith.sitofp %31 : vector<8x56xi32> to vector<8x56xf32>
    %cst_10 = arith.constant dense<0.000000e+00> : vector<8x64xf32>
    %33 = tpu.matmul %32, %0, %cst_10 {dimension_numbers = #tpu.dot_dimension_numbers<[1], [0], [0], [1], [0, 0, 1, 1], [], []>} : vector<8x56xf32>, vector<56x64xf32>, vector<8x64xf32> -> vector<8x64xf32>
    %34 = vector.extract_strided_slice %33 {offsets = [0, 0], sizes = [8, 32], strides = [1, 1]} : vector<8x64xf32> to vector<8x32xf32>
    %35 = vector.extract_strided_slice %33 {offsets = [0, 32], sizes = [8, 32], strides = [1, 1]} : vector<8x64xf32> to vector<8x32xf32>
    %c0_11 = arith.constant 0 : index
    %c4 = arith.constant 4 : index
    %36 = vector.load %arg3[%c0_11, %c4] : memref<8x8xi32, #tpu.memory_space<vmem>>, vector<8x1xi32>
    %37 = vector.broadcast %36 : vector<8x1xi32> to vector<8x16xi32>
    %38 = arith.cmpi eq, %37, %3 : vector<8x16xi32>
    %39 = arith.extui %38 : vector<8x16xi1> to vector<8x16xi32>
    %40 = arith.sitofp %39 : vector<8x16xi32> to vector<8x16xf32>
    %cst_12 = arith.constant dense<0.000000e+00> : vector<8x64xf32>
    %41 = tpu.matmul %40, %1, %cst_12 {dimension_numbers = #tpu.dot_dimension_numbers<[1], [0], [0], [1], [0, 0, 1, 1], [], []>} : vector<8x16xf32>, vector<16x64xf32>, vector<8x64xf32> -> vector<8x64xf32>
    %42 = vector.extract_strided_slice %41 {offsets = [0, 0], sizes = [8, 32], strides = [1, 1]} : vector<8x64xf32> to vector<8x32xf32>
    %43 = vector.extract_strided_slice %41 {offsets = [0, 32], sizes = [8, 32], strides = [1, 1]} : vector<8x64xf32> to vector<8x32xf32>
    %44 = arith.mulf %10, %11 : vector<8x32xf32>
    %cst_13 = arith.constant dense<0.000000e+00> : vector<8xf32>
    %45 = vector.multi_reduction <add>, %44, %cst_13 [1] : vector<8x32xf32> to vector<8xf32>
    %46 = vector.shape_cast %45 : vector<8xf32> to vector<8x1xf32>
    %47 = vector.broadcast %46 : vector<8x1xf32> to vector<8x32xf32>
    %48 = arith.mulf %47, %43 : vector<8x32xf32>
    %49 = arith.addf %10, %48 : vector<8x32xf32>
    %50 = arith.mulf %49, %49 : vector<8x32xf32>
    %cst_14 = arith.constant dense<0.000000e+00> : vector<8xf32>
    %51 = vector.multi_reduction <add>, %50, %cst_14 [1] : vector<8x32xf32> to vector<8xf32>
    %52 = vector.shape_cast %51 : vector<8xf32> to vector<8x1xf32>
    %cst_15 = arith.constant 1.000000e-24 : f32
    %53 = vector.broadcast %cst_15 : f32 to vector<8x1xf32>
    %54 = arith.maximumf %52, %53 : vector<8x1xf32>
    %55 = math.rsqrt %54 : vector<8x1xf32>
    %56 = vector.broadcast %55 : vector<8x1xf32> to vector<8x32xf32>
    %57 = arith.mulf %49, %56 : vector<8x32xf32>
    %58 = arith.addf %57, %42 : vector<8x32xf32>
    %59 = arith.mulf %18, %19 : vector<8x32xf32>
    %cst_16 = arith.constant dense<0.000000e+00> : vector<8xf32>
    %60 = vector.multi_reduction <add>, %59, %cst_16 [1] : vector<8x32xf32> to vector<8xf32>
    %61 = vector.shape_cast %60 : vector<8xf32> to vector<8x1xf32>
    %62 = vector.broadcast %61 : vector<8x1xf32> to vector<8x32xf32>
    %63 = arith.mulf %62, %43 : vector<8x32xf32>
    %64 = arith.addf %18, %63 : vector<8x32xf32>
    %65 = arith.mulf %64, %64 : vector<8x32xf32>
    %cst_17 = arith.constant dense<0.000000e+00> : vector<8xf32>
    %66 = vector.multi_reduction <add>, %65, %cst_17 [1] : vector<8x32xf32> to vector<8xf32>
    %67 = vector.shape_cast %66 : vector<8xf32> to vector<8x1xf32>
    %cst_18 = arith.constant 1.000000e-24 : f32
    %68 = vector.broadcast %cst_18 : f32 to vector<8x1xf32>
    %69 = arith.maximumf %67, %68 : vector<8x1xf32>
    %70 = math.rsqrt %69 : vector<8x1xf32>
    %71 = vector.broadcast %70 : vector<8x1xf32> to vector<8x32xf32>
    %72 = arith.mulf %64, %71 : vector<8x32xf32>
    %73 = arith.subf %58, %72 : vector<8x32xf32>
    %74 = arith.mulf %73, %73 : vector<8x32xf32>
    %cst_19 = arith.constant dense<0.000000e+00> : vector<8xf32>
    %75 = vector.multi_reduction <add>, %74, %cst_19 [1] : vector<8x32xf32> to vector<8xf32>
    %76 = vector.shape_cast %75 : vector<8xf32> to vector<8x1xf32>
    %77 = math.sqrt %76 : vector<8x1xf32>
    %78 = arith.mulf %26, %27 : vector<8x32xf32>
    %cst_20 = arith.constant dense<0.000000e+00> : vector<8xf32>
    %79 = vector.multi_reduction <add>, %78, %cst_20 [1] : vector<8x32xf32> to vector<8xf32>
    %80 = vector.shape_cast %79 : vector<8xf32> to vector<8x1xf32>
    %81 = vector.broadcast %80 : vector<8x1xf32> to vector<8x32xf32>
    %82 = arith.mulf %81, %43 : vector<8x32xf32>
    %83 = arith.addf %26, %82 : vector<8x32xf32>
    %84 = arith.mulf %83, %83 : vector<8x32xf32>
    %cst_21 = arith.constant dense<0.000000e+00> : vector<8xf32>
    %85 = vector.multi_reduction <add>, %84, %cst_21 [1] : vector<8x32xf32> to vector<8xf32>
    %86 = vector.shape_cast %85 : vector<8xf32> to vector<8x1xf32>
    %cst_22 = arith.constant 1.000000e-24 : f32
    %87 = vector.broadcast %cst_22 : f32 to vector<8x1xf32>
    %88 = arith.maximumf %86, %87 : vector<8x1xf32>
    %89 = math.rsqrt %88 : vector<8x1xf32>
    %90 = vector.broadcast %89 : vector<8x1xf32> to vector<8x32xf32>
    %91 = arith.mulf %83, %90 : vector<8x32xf32>
    %92 = arith.addf %91, %42 : vector<8x32xf32>
    %93 = arith.mulf %34, %35 : vector<8x32xf32>
    %cst_23 = arith.constant dense<0.000000e+00> : vector<8xf32>
    %94 = vector.multi_reduction <add>, %93, %cst_23 [1] : vector<8x32xf32> to vector<8xf32>
    %95 = vector.shape_cast %94 : vector<8xf32> to vector<8x1xf32>
    %96 = vector.broadcast %95 : vector<8x1xf32> to vector<8x32xf32>
    %97 = arith.mulf %96, %43 : vector<8x32xf32>
    %98 = arith.addf %34, %97 : vector<8x32xf32>
    %99 = arith.mulf %98, %98 : vector<8x32xf32>
    %cst_24 = arith.constant dense<0.000000e+00> : vector<8xf32>
    %100 = vector.multi_reduction <add>, %99, %cst_24 [1] : vector<8x32xf32> to vector<8xf32>
    %101 = vector.shape_cast %100 : vector<8xf32> to vector<8x1xf32>
    %cst_25 = arith.constant 1.000000e-24 : f32
    %102 = vector.broadcast %cst_25 : f32 to vector<8x1xf32>
    %103 = arith.maximumf %101, %102 : vector<8x1xf32>
    %104 = math.rsqrt %103 : vector<8x1xf32>
    %105 = vector.broadcast %104 : vector<8x1xf32> to vector<8x32xf32>
    %106 = arith.mulf %98, %105 : vector<8x32xf32>
    %107 = arith.subf %92, %106 : vector<8x32xf32>
    %108 = arith.mulf %107, %107 : vector<8x32xf32>
    %cst_26 = arith.constant dense<0.000000e+00> : vector<8xf32>
    %109 = vector.multi_reduction <add>, %108, %cst_26 [1] : vector<8x32xf32> to vector<8xf32>
    %110 = vector.shape_cast %109 : vector<8xf32> to vector<8x1xf32>
    %111 = math.sqrt %110 : vector<8x1xf32>
    %c0_27 = arith.constant 0 : index
    %112 = memref.load %arg2[%c0_27] : memref<1xf32, #tpu.memory_space<smem>>
    %c0_28 = arith.constant 0 : index
    %113 = memref.load %arg1[%c0_28] : memref<1xi32, #tpu.memory_space<smem>>
    %114 = arith.subf %77, %111 : vector<8x1xf32>
    %115 = vector.broadcast %112 : f32 to vector<8x1xf32>
    %116 = arith.addf %114, %115 : vector<8x1xf32>
    %cst_29 = arith.constant 0.000000e+00 : f32
    %117 = vector.broadcast %cst_29 : f32 to vector<8x1xf32>
    %118 = arith.maximumf %116, %117 : vector<8x1xf32>
    %c8_i32 = arith.constant 8 : i32
    %119 = arith.muli %arg0, %c8_i32 : i32
    %120 = tpu.iota {dimensions = array<i32: 0>} : vector<8x1xi32>
    %121 = vector.broadcast %119 : i32 to vector<8x1xi32>
    %122 = arith.addi %121, %120 : vector<8x1xi32>
    %123 = vector.broadcast %113 : i32 to vector<8x1xi32>
    %124 = arith.cmpi slt, %122, %123 : vector<8x1xi32>
    %cst_30 = arith.constant 0.000000e+00 : f32
    %125 = vector.broadcast %cst_30 : f32 to vector<8x1xf32>
    %126 = arith.select %124, %118, %125 : vector<8x1xi1>, vector<8x1xf32>
    %cst_31 = arith.constant 0.000000e+00 : f32
    %127 = vector.broadcast %cst_31 : f32 to vector<8x128xf32>
    %128 = vector.shape_cast %126 : vector<8x1xf32> to vector<1x8x1xf32>
    %cst_32 = arith.constant dense<0.000000e+00> : vector<1xf32>
    %129 = vector.multi_reduction <add>, %128, %cst_32 [1, 2] : vector<1x8x1xf32> to vector<1xf32>
    %130 = vector.shape_cast %129 : vector<1xf32> to vector<1x1x1xf32>
    %131 = vector.extract %130[0, 0, 0] : f32 from vector<1x1x1xf32>
    %132 = vector.broadcast %131 : f32 to vector<8x128xf32>
    %133 = arith.addf %127, %132 : vector<8x128xf32>
    %c0_33 = arith.constant 0 : index
    %c0_34 = arith.constant 0 : index
    %134 = vector.load %arg6[%c0_33, %c0_34] : memref<8x128xf32, #tpu.memory_space<vmem>>, vector<8x128xf32>
    tpu.vector_store %arg6[%c0_33, %c0_34], %133 {strides = array<i32>} : memref<8x128xf32, #tpu.memory_space<vmem>>, vector<8x128xf32>,
    return
  }
  func.func @transform_0(%arg0: i32) -> i32 {
    %c0_i32 = arith.constant 0 : i32
    %c0_i32_0 = arith.constant 0 : i32
    return %c0_i32 : i32
  }
  func.func @transform_1(%arg0: i32) -> i32 {
    %c0_i32 = arith.constant 0 : i32
    %c0_i32_0 = arith.constant 0 : i32
    return %c0_i32 : i32
  }
  func.func @transform_2(%arg0: i32) -> (i32, i32) {
    %c0_i32 = arith.constant 0 : i32
    %c0_i32_0 = arith.constant 0 : i32
    return %arg0, %c0_i32 : i32, i32
  }
  func.func @transform_3(%arg0: i32) -> (i32, i32) {
    %c0_i32 = arith.constant 0 : i32
    %c0_i32_0 = arith.constant 0 : i32
    %c0_i32_1 = arith.constant 0 : i32
    return %c0_i32, %c0_i32_0 : i32, i32
  }
  func.func @transform_4(%arg0: i32) -> (i32, i32) {
    %c0_i32 = arith.constant 0 : i32
    %c0_i32_0 = arith.constant 0 : i32
    %c0_i32_1 = arith.constant 0 : i32
    return %c0_i32, %c0_i32_0 : i32, i32
  }
  func.func @transform_5(%arg0: i32) -> (i32, i32) {
    %c0_i32 = arith.constant 0 : i32
    %c0_i32_0 = arith.constant 0 : i32
    return %arg0, %c0_i32 : i32, i32
  }
}

</mosaic_0001>

<llo_original>
// kernel: tpu_custom_call.1
$region0: #{tpu_custom_call.1}
  #allocation0 [shape = 'u32[]', space=smem, size = 0x4, offset = 0x4, fixed_abs, tag = 'smem constant byte address 0x4 - core index']
  #allocation1 [shape = 'u32[144,128]{1,0:T(1,128)}', space=vmem, size = 0x12000, scoped, tag = 'internal scratch']
  #allocation2 [shape = 's32[1]{0:T(128)S(6)}', space=smem, size = 0x200, scoped, tag = 'scoped memory for tpu_custom_call.1']
  #allocation3 [shape = 'f32[1]{0:T(128)S(6)}', space=smem, size = 0x200, scoped, tag = 'scoped memory for tpu_custom_call.1']
  %s0 = inlined_call_operand.<no memory space> [shape: s32[1], index: 0, kind: input, shape index: {}]
  %s1 = inlined_call_operand.<no memory space> [shape: f32[1], index: 1, kind: input, shape index: {}]
  %s2 = inlined_call_operand.vmem [shape: s32[16,8], index: 2, kind: input, shape index: {}]
  %s3 = inlined_call_operand.hbm [shape: f32[56,64], index: 3, kind: input, shape index: {}]
  %s4 = inlined_call_operand.vmem [shape: f32[16,64], index: 4, kind: input, shape index: {}]
  %s5 = inlined_call_operand.hbm [shape: f32[16,128], index: 5, kind: output, shape index: {}]
  %s6 = sld [smem:[#allocation0]]
  $region57: #{tpu_custom_call.1} parent=0
    _
  %s8 = ssub.s32 1, %s6
  %s9 = scalar_select 0, %s8, %s6
  %10 = sst [smem:[#allocation2]] %s0
  %11 = sst [smem:[#allocation3]] %s1
  $region1: #{tpu_custom_call.1} parent=0
    #allocation4 [shape = 'u8[28672]{0}', space=vmem, size = 0x7000, scoped, tag = 'input window, operand 3, single buffered']
    #allocation5 [shape = 's32[2]{0}', space=sflag, size = 0x8, scoped, tag = 'scoped memory for tpu_custom_call.1']
    #allocation6 [shape = 's32[2]{0}', space=sflag, size = 0x8, scoped, tag = 'scoped memory for tpu_custom_call.1']
    #allocation7 [shape = 'u8[8192]{0}', space=vmem, size = 0x2000, scoped, tag = 'output window, operand 0']
    %12 = vsyncpa [#allocation5], 0
    %13 = vsyncpa [#allocation6], 0
    %s14 = scalar_lea.sflag [#allocation6], 1
    %15 = vsyncpa %s14, 0
    loop: start=0, step=1, limit=4
    $region2: #{tpu_custom_call.1} parent=1 // loop_pre_header
      _
    $region3: #{tpu_custom_call.1} parent=1 // loop_header
      %s17 = sphi 0, %s21
      %p18 = scmp.ge.s32.totalorder %s17, 4
      %s25 = sphi 0, %s25
      %s27 = sphi 0, %s25
      %s28 = sphi 0, %s27
      %s42 = sphi 0, %s28
      %s46 = sphi 0, %s46
      %s48 = sphi 0, %s46
      %s49 = sphi 0, %s48
      %s63 = sphi 0, %s49
      %s69 = sphi 0, %s71
      %s72 = sphi 0, %s69
      %s73 = sphi 0, %s72
      %s89 = sphi 0, %s73
      %s93 = sphi 0, %s93
      %s95 = sphi 0, %s93
      %s96 = sphi 0, %s95
      %s110 = sphi 0, %s96
      %s114 = sphi 0, %s114
      %s116 = sphi 0, %s114
      %s117 = sphi 0, %s116
      %s131 = sphi 0, %s117
      %s137 = sphi 0, %s139
      %s140 = sphi 0, %s137
      %s141 = sphi 0, %s140
      %s157 = sphi 0, %s141
    $region4: #{tpu_custom_call.1} parent=1 // loop_header_branch
      %20 = sbr.rel (%p18) target = $region8
    $region5: #{tpu_custom_call.1} parent=1 // loop_body
      %s22 = ssub.s32 %s17, 1
      %s23 = ssub.s32 %s17, 2
      %s24 = sadd.s32 %s17, 1
      %s26 = sadd.s32 %s25, 1
      %p29 = scmp.eq.s32.totalorder %s17, 1
      %p30 = scmp.ne.s32.totalorder %s25, %s27
      %p31 = scmp.eq.s32.totalorder %s17, 0
      %p32 = por %p30, %p31
      %p33 = scmp.ne.s32.totalorder %s25, %s27
      %p34 = scmp.eq.s32.totalorder %s22, 1
      %p35 = por %p33, %p34
      %p36 = scmp.ne.s32.totalorder %s27, %s28
      %p37 = scmp.eq.s32.totalorder %s22, 0
      %p38 = por %p36, %p37
      %p39 = scmp.ne.s32.totalorder %s27, %s28
      %p40 = scmp.eq.s32.totalorder %s23, 1
      %p41 = por %p39, %p40
      %p43 = scmp.ne.s32.totalorder %s28, %s42
      %p44 = scmp.eq.s32.totalorder %s23, 0
      %p45 = por %p43, %p44
      %s47 = sadd.s32 %s46, 1
      %p50 = scmp.eq.s32.totalorder %s17, 1
      %p51 = scmp.ne.s32.totalorder %s46, %s48
      %p52 = scmp.eq.s32.totalorder %s17, 0
      %p53 = por %p51, %p52
      %p54 = scmp.ne.s32.totalorder %s46, %s48
      %p55 = scmp.eq.s32.totalorder %s22, 1
      %p56 = por %p54, %p55
      %p57 = scmp.ne.s32.totalorder %s48, %s49
      %p58 = scmp.eq.s32.totalorder %s22, 0
      %p59 = por %p57, %p58
      %p60 = scmp.ne.s32.totalorder %s48, %s49
      %p61 = scmp.eq.s32.totalorder %s23, 1
      %p62 = por %p60, %p61
      %p64 = scmp.ne.s32.totalorder %s49, %s63
      %p65 = scmp.eq.s32.totalorder %s23, 0
      %p66 = por %p64, %p65
      %s67 = ssub.s32 %s17, %s24
      %p68 = scmp.eq.s32.totalorder %s67, 0
      %s70 = sadd.s32 %s69, 1
      %s71 = scalar_select %p68, %s69, %s70
      %p74 = pneg %p68
      %p75 = scmp.eq.s32.totalorder %s17, 1
      %p76 = por %p74, %p75
      %p77 = scmp.ne.s32.totalorder %s69, %s72
      %p78 = scmp.eq.s32.totalorder %s17, 0
      %p79 = por %p77, %p78
      %p80 = scmp.ne.s32.totalorder %s69, %s72
      %p81 = scmp.eq.s32.totalorder %s22, 1
      %p82 = por %p80, %p81
      %p83 = scmp.ne.s32.totalorder %s72, %s73
      %p84 = scmp.eq.s32.totalorder %s22, 0
      %p85 = por %p83, %p84
      %p86 = scmp.ne.s32.totalorder %s72, %s73
      %p87 = scmp.eq.s32.totalorder %s23, 1
      %p88 = por %p86, %p87
      %p90 = scmp.ne.s32.totalorder %s73, %s89
      %p91 = scmp.eq.s32.totalorder %s23, 0
      %p92 = por %p90, %p91
      %s94 = sadd.s32 %s93, 1
      %p97 = scmp.eq.s32.totalorder %s17, 1
      %p98 = scmp.ne.s32.totalorder %s93, %s95
      %p99 = scmp.eq.s32.totalorder %s17, 0
      %p100 = por %p98, %p99
      %p101 = scmp.ne.s32.totalorder %s93, %s95
      %p102 = scmp.eq.s32.totalorder %s22, 1
      %p103 = por %p101, %p102
      %p104 = scmp.ne.s32.totalorder %s95, %s96
      %p105 = scmp.eq.s32.totalorder %s22, 0
      %p106 = por %p104, %p105
      %p107 = scmp.ne.s32.totalorder %s95, %s96
      %p108 = scmp.eq.s32.totalorder %s23, 1
      %p109 = por %p107, %p108
      %p111 = scmp.ne.s32.totalorder %s96, %s110
      %p112 = scmp.eq.s32.totalorder %s23, 0
      %p113 = por %p111, %p112
      %s115 = sadd.s32 %s114, 1
      %p118 = scmp.eq.s32.totalorder %s17, 1
      %p119 = scmp.ne.s32.totalorder %s114, %s116
      %p120 = scmp.eq.s32.totalorder %s17, 0
      %p121 = por %p119, %p120
      %p122 = scmp.ne.s32.totalorder %s114, %s116
      %p123 = scmp.eq.s32.totalorder %s22, 1
      %p124 = por %p122, %p123
      %p125 = scmp.ne.s32.totalorder %s116, %s117
      %p126 = scmp.eq.s32.totalorder %s22, 0
      %p127 = por %p125, %p126
      %p128 = scmp.ne.s32.totalorder %s116, %s117
      %p129 = scmp.eq.s32.totalorder %s23, 1
      %p130 = por %p128, %p129
      %p132 = scmp.ne.s32.totalorder %s117, %s131
      %p133 = scmp.eq.s32.totalorder %s23, 0
      %p134 = por %p132, %p133
      %s135 = ssub.s32 %s17, %s24
      %p136 = scmp.eq.s32.totalorder %s135, 0
      %s138 = sadd.s32 %s137, 1
      %s139 = scalar_select %p136, %s137, %s138
      %p142 = pneg %p136
      %p143 = scmp.eq.s32.totalorder %s17, 1
      %p144 = por %p142, %p143
      %p145 = scmp.ne.s32.totalorder %s137, %s140
      %p146 = scmp.eq.s32.totalorder %s17, 0
      %p147 = por %p145, %p146
      %p148 = scmp.ne.s32.totalorder %s137, %s140
      %p149 = scmp.eq.s32.totalorder %s22, 1
      %p150 = por %p148, %p149
      %p151 = scmp.ne.s32.totalorder %s140, %s141
      %p152 = scmp.eq.s32.totalorder %s22, 0
      %p153 = por %p151, %p152
      %p154 = scmp.ne.s32.totalorder %s140, %s141
      %p155 = scmp.eq.s32.totalorder %s23, 1
      %p156 = por %p154, %p155
      %p158 = scmp.ne.s32.totalorder %s141, %s157
      %p159 = scmp.eq.s32.totalorder %s23, 0
      %p160 = por %p158, %p159
      %p161 = scmp.le.s32.totalorder 1, %s17
      %p162 = scmp.lt.s32.totalorder %s17, 3
      %p163 = pnand %p161, %p162
      %p164 = pneg %p163
      // Predicated region
      $region9: #{tpu_custom_call.1} parent=5 // pred_check
        _
      $region10: #{tpu_custom_call.1} parent=5 // pred_check_branch
        %166 = sbr.rel (%p163) target = $region12
      $region11: #{tpu_custom_call.1} parent=5 // pred_region
        %s167 = ssub.s32 %s17, 1
        // Predicated region
        $region13: #{tpu_custom_call.1} parent=11 // pred_check
          %p168 = pneg %p38
        $region14: #{tpu_custom_call.1} parent=11 // pred_check_branch
          %170 = sbr.rel (%p168) target = $region16
        $region15: #{tpu_custom_call.1} parent=11 // pred_region
          _
        $region16: #{tpu_custom_call.1} parent=11 // pred_fallthru
          _
        // Predicated region
        $region17: #{tpu_custom_call.1} parent=11 // pred_check
          %p171 = pneg %p59
        $region18: #{tpu_custom_call.1} parent=11 // pred_check_branch
          %173 = sbr.rel (%p171) target = $region20
        $region19: #{tpu_custom_call.1} parent=11 // pred_region
          _
        $region20: #{tpu_custom_call.1} parent=11 // pred_fallthru
          _
        // Predicated region
        $region21: #{tpu_custom_call.1} parent=11 // pred_check
          %p174 = pneg %p106
        $region22: #{tpu_custom_call.1} parent=11 // pred_check_branch
          %176 = sbr.rel (%p174) target = $region24
        $region23: #{tpu_custom_call.1} parent=11 // pred_region
          %s178 = ssub.s32 896, 896
          %179 = vsyncadd [#allocation5], %s178
          %s180 = sshll.u32 [#allocation4], 4
          %s181 = int_to_ptr.vmem [resolvable:$true] %s180
          %186 = dma.hbm_to_vmem [thread:$0]  %s3, 896, %s181, [#allocation5], 128, 128, 8
        $region24: #{tpu_custom_call.1} parent=11 // pred_fallthru
          _
        // Predicated region
        $region25: #{tpu_custom_call.1} parent=11 // pred_check
          %p187 = pneg %p127
        $region26: #{tpu_custom_call.1} parent=11 // pred_check_branch
          %189 = sbr.rel (%p187) target = $region28
        $region27: #{tpu_custom_call.1} parent=11 // pred_region
          _
        $region28: #{tpu_custom_call.1} parent=11 // pred_fallthru
          _
      $region12: #{tpu_custom_call.1} parent=5 // pred_fallthru
        _
      %p190 = scmp.lt.s32.totalorder %s17, 2
      // Predicated region
      $region29: #{tpu_custom_call.1} parent=5 // pred_check
        %p191 = pneg %p190
      $region30: #{tpu_custom_call.1} parent=5 // pred_check_branch
        %193 = sbr.rel (%p191) target = $region32
      $region31: #{tpu_custom_call.1} parent=5 // pred_region
        // Predicated region
        $region33: #{tpu_custom_call.1} parent=31 // pred_check
          %p194 = pneg %p79
        $region34: #{tpu_custom_call.1} parent=31 // pred_check_branch
          %196 = sbr.rel (%p194) target = $region36
        $region35: #{tpu_custom_call.1} parent=31 // pred_region
          %p197 = scmp.lt.s32.totalorder %s17, 1
          %s198 = scalar_select %p197, %s17, 1
          %s199 = smul.addr %s198, 8
          %s200 = scalar_lea.vmem %s2, %s199
        $region36: #{tpu_custom_call.1} parent=31 // pred_fallthru
          _
      $region32: #{tpu_custom_call.1} parent=5 // pred_fallthru
        _
      %p201 = scmp.le.s32.totalorder 1, %s17
      %p202 = scmp.lt.s32.totalorder %s17, 3
      %p203 = pnand %p201, %p202
      %p204 = pneg %p203
      // Predicated region
      $region37: #{tpu_custom_call.1} parent=5 // pred_check
        _
      $region38: #{tpu_custom_call.1} parent=5 // pred_check_branch
        %206 = sbr.rel (%p203) target = $region40
      $region39: #{tpu_custom_call.1} parent=5 // pred_region
        %s207 = ssub.s32 %s17, 1
        // Predicated region
        $region41: #{tpu_custom_call.1} parent=39 // pred_check
          %p208 = pneg %p106
        $region42: #{tpu_custom_call.1} parent=39 // pred_check_branch
          %210 = sbr.rel (%p208) target = $region44
        $region43: #{tpu_custom_call.1} parent=39 // pred_region
          %211 = dma.done [#allocation5], 896
        $region44: #{tpu_custom_call.1} parent=39 // pred_fallthru
          _
        %p212 = pneg %p38
        %p213 = pneg %p35
        %p214 = pneg %p59
        %p215 = pneg %p56
        %p216 = scmp.lt.s32.totalorder %s22, 1
        %s217 = scalar_select %p216, %s22, 1
        %s218 = smul.addr %s217, 8
        %s219 = scalar_lea.vmem %s2, %s218
        %p220 = pneg %p85
        %p221 = pneg %p82
        %p222 = pneg %p106
        %p223 = pneg %p103
        %p224 = pneg %p127
        %p225 = pneg %p124
        %p226 = pneg %p153
        %p227 = pneg %p150
        %s228 = sand.u32 %s140, 1
        %s229 = scalar_lea.sflag [#allocation6], %s228
        %s230 = sand.u32 %s140, 1
        %s231 = smul.addr %s230, 8
        %s232 = scalar_lea.vmem [#allocation7], %s231
        %p233 = scmp.lt.s32.totalorder %s22, 1
        %s234 = scalar_select %p233, %s22, 1
        %s235 = smul.addr %s234, 8
        %s236 = scalar_lea.vmem %s2, %s235
        %v237 = vld [vmem:[#allocation4] sm:$0xff]
        %v238 = vld [vmem:[#allocation4 + $0x8] sm:$0xff]
        %v239 = vld [vmem:[#allocation4 + $0x10] sm:$0xff]
        %v240 = vld [vmem:[#allocation4 + $0x18] sm:$0xff]
        %v241 = vld [vmem:[#allocation4 + $0x20] sm:$0xff]
        %v242 = vld [vmem:[#allocation4 + $0x28] sm:$0xff]
        %v243 = vld [vmem:[#allocation4 + $0x30] sm:$0xff]
        %v244 = vld [vmem:[%s4] sm:$0xff]
        %v245 = vld [vmem:[%s4 + $0x8] sm:$0xff]
        %v246 = vlaneseq
        %v247 = vand.u32 %v246, 127
        %v248 = vld [vmem:[%s236] sm:$0xff]
        %249 = vset.pattern.permute.xlu0 0
        %250 = vperm.xlu0 %249, %v248
        %v251 = vpop.permute.xlu0 %250
        %vm252 = vcmp.eq.s32.totalorder %v251, %v247
        %v253 = vsel %vm252, 1, 0
        %v254 = vcvt.s32.f32 %v253
        %vm255 = vcmask 457728
        %v257 = vsel %vm255, %v254, 0
        %259 = vmatprep.subr.mxu0 0.0
        %260 = vmatpush1.msra.mxu0 0.0
        %261 = vmatprep.subr.mxu0 0.0
        %262 = vmatpush1.msra.mxu0 0.0
        %263 = vmatprep.subr.mxu0 0.0
        %264 = vmatpush1.msra.mxu0 0.0
        %265 = vmatprep.subr.mxu0 0.0
        %266 = vmatpush1.msra.mxu0 0.0
        %267 = vmatprep.subr.mxu0 0.0
        %268 = vmatpush1.msra.mxu0 0.0
        %269 = vmatprep.subr.mxu0 0.0
        %270 = vmatpush1.msra.mxu0 0.0
        %271 = vmatprep.subr.mxu0 0.0
        %272 = vmatpush1.msra.mxu0 0.0
        %273 = vmatprep.subr.mxu0 0.0
        %274 = vmatpush1.msra.mxu0 0.0
        %275 = vmatprep.subr.mxu0 0.0
        %276 = vmatpush1.msra.mxu0 0.0
        %277 = vmatprep.subr.mxu0 0.0
        %278 = vmatpush1.msra.mxu0 %v243
        %279 = vmatprep.subr.mxu0 0.0
        %280 = vmatpush1.msra.mxu0 %v242
        %281 = vmatprep.subr.mxu0 0.0
        %282 = vmatpush1.msra.mxu0 %v241
        %283 = vmatprep.subr.mxu0 0.0
        %284 = vmatpush1.msra.mxu0 %v240
        %285 = vmatprep.subr.mxu0 0.0
        %286 = vmatpush1.msra.mxu0 %v239
        %287 = vmatprep.subr.mxu0 0.0
        %288 = vmatpush1.msra.mxu0 %v238
        %289 = vmatprep.subr.mxu0 0.0
        %290 = vmatpush1.msra.mxu0 %v237
        %291 = vmatprep.subr.mxu0 0.0
        %292 = vmatpush2.msra.mxu0 0.0
        %293 = vmatprep.subr.mxu0 0.0
        %294 = vmatpush2.msra.mxu0 0.0
        %295 = vmatprep.subr.mxu0 0.0
        %296 = vmatpush2.msra.mxu0 0.0
        %297 = vmatprep.subr.mxu0 0.0
        %298 = vmatpush2.msra.mxu0 0.0
        %299 = vmatprep.subr.mxu0 0.0
        %300 = vmatpush2.msra.mxu0 0.0
        %301 = vmatprep.subr.mxu0 0.0
        %302 = vmatpush2.msra.mxu0 0.0
        %303 = vmatprep.subr.mxu0 0.0
        %304 = vmatpush2.msra.mxu0 0.0
        %305 = vmatprep.subr.mxu0 0.0
        %306 = vmatpush2.msra.mxu0 0.0
        %307 = vmatprep.subr.mxu0 0.0
        %308 = vmatpush2.msra.mxu0 0.0
        %309 = vmatprep.subr.mxu0 0.0
        %310 = vmatpush2.msra.mxu0 0.0
        %311 = vmatprep.subr.mxu0 0.0
        %312 = vmatpush2.msra.mxu0 0.0
        %313 = vmatprep.subr.mxu0 0.0
        %314 = vmatpush2.msra.mxu0 0.0
        %315 = vmatprep.subr.mxu0 0.0
        %316 = vmatpush2.msra.mxu0 0.0
        %317 = vmatprep.subr.mxu0 0.0
        %318 = vmatpush2.msra.mxu0 0.0
        %319 = vmatprep.subr.mxu0 0.0
        %320 = vmatpush2.msra.mxu0 0.0
        %321 = vmatprep.subr.mxu0 0.0
        %322 = vmatpush2.msra.mxu0 0.0
        %323 = vmatprep.mubr.f32.mxu0 0.0
        %324 = vmatmul.mubr.f32.gmra.mxu0 %v257
        %v325 = vpop.f32.mrf.mxu0
        %v326 = vadd.f32 0.0, %v325
        %v327 = vpop.f32.mrf.mxu0
        %328 = vdwg.mxu0
        %329 = vset.pattern.permute.xlu0 1
        %330 = vperm.xlu0 %329, %v248
        %v331 = vpop.permute.xlu0 %330
        %vm332 = vcmp.eq.s32.totalorder %v331, %v247
        %v333 = vsel %vm332, 1, 0
        %v334 = vcvt.s32.f32 %v333
        %v336 = vsel %vm255, %v334, 0
        %338 = vmatprep.subr.mxu0 0.0
        %339 = vmatpush1.msra.mxu0 0.0
        %340 = vmatprep.subr.mxu0 0.0
        %341 = vmatpush1.msra.mxu0 0.0
        %342 = vmatprep.subr.mxu0 0.0
        %343 = vmatpush1.msra.mxu0 0.0
        %344 = vmatprep.subr.mxu0 0.0
        %345 = vmatpush1.msra.mxu0 0.0
        %346 = vmatprep.subr.mxu0 0.0
        %347 = vmatpush1.msra.mxu0 0.0
        %348 = vmatprep.subr.mxu0 0.0
        %349 = vmatpush1.msra.mxu0 0.0
        %350 = vmatprep.subr.mxu0 0.0
        %351 = vmatpush1.msra.mxu0 0.0
        %352 = vmatprep.subr.mxu0 0.0
        %353 = vmatpush1.msra.mxu0 0.0
        %354 = vmatprep.subr.mxu0 0.0
        %355 = vmatpush1.msra.mxu0 0.0
        %356 = vmatprep.subr.mxu0 0.0
        %357 = vmatpush1.msra.mxu0 %v243
        %358 = vmatprep.subr.mxu0 0.0
        %359 = vmatpush1.msra.mxu0 %v242
        %360 = vmatprep.subr.mxu0 0.0
        %361 = vmatpush1.msra.mxu0 %v241
        %362 = vmatprep.subr.mxu0 0.0
        %363 = vmatpush1.msra.mxu0 %v240
        %364 = vmatprep.subr.mxu0 0.0
        %365 = vmatpush1.msra.mxu0 %v239
        %366 = vmatprep.subr.mxu0 0.0
        %367 = vmatpush1.msra.mxu0 %v238
        %368 = vmatprep.subr.mxu0 0.0
        %369 = vmatpush1.msra.mxu0 %v237
        %370 = vmatprep.subr.mxu0 0.0
        %371 = vmatpush2.msra.mxu0 0.0
        %372 = vmatprep.subr.mxu0 0.0
        %373 = vmatpush2.msra.mxu0 0.0
        %374 = vmatprep.subr.mxu0 0.0
        %375 = vmatpush2.msra.mxu0 0.0
        %376 = vmatprep.subr.mxu0 0.0
        %377 = vmatpush2.msra.mxu0 0.0
        %378 = vmatprep.subr.mxu0 0.0
        %379 = vmatpush2.msra.mxu0 0.0
        %380 = vmatprep.subr.mxu0 0.0
        %381 = vmatpush2.msra.mxu0 0.0
        %382 = vmatprep.subr.mxu0 0.0
        %383 = vmatpush2.msra.mxu0 0.0
        %384 = vmatprep.subr.mxu0 0.0
        %385 = vmatpush2.msra.mxu0 0.0
        %386 = vmatprep.subr.mxu0 0.0
        %387 = vmatpush2.msra.mxu0 0.0
        %388 = vmatprep.subr.mxu0 0.0
        %389 = vmatpush2.msra.mxu0 0.0
        %390 = vmatprep.subr.mxu0 0.0
        %391 = vmatpush2.msra.mxu0 0.0
        %392 = vmatprep.subr.mxu0 0.0
        %393 = vmatpush2.msra.mxu0 0.0
        %394 = vmatprep.subr.mxu0 0.0
        %395 = vmatpush2.msra.mxu0 0.0
        %396 = vmatprep.subr.mxu0 0.0
        %397 = vmatpush2.msra.mxu0 0.0
        %398 = vmatprep.subr.mxu0 0.0
        %399 = vmatpush2.msra.mxu0 0.0
        %400 = vmatprep.subr.mxu0 0.0
        %401 = vmatpush2.msra.mxu0 0.0
        %402 = vmatprep.mubr.f32.mxu0 0.0
        %403 = vmatmul.mubr.f32.gmra.mxu0 %v336
        %v404 = vpop.f32.mrf.mxu0
        %v405 = vadd.f32 0.0, %v404
        %v406 = vpop.f32.mrf.mxu0
        %407 = vdwg.mxu0
        %408 = vset.pattern.permute.xlu0 2
        %409 = vperm.xlu0 %408, %v248
        %v410 = vpop.permute.xlu0 %409
        %vm411 = vcmp.eq.s32.totalorder %v410, %v247
        %v412 = vsel %vm411, 1, 0
        %v413 = vcvt.s32.f32 %v412
        %v415 = vsel %vm255, %v413, 0
        %417 = vmatprep.subr.mxu0 0.0
        %418 = vmatpush1.msra.mxu0 0.0
        %419 = vmatprep.subr.mxu0 0.0
        %420 = vmatpush1.msra.mxu0 0.0
        %421 = vmatprep.subr.mxu0 0.0
        %422 = vmatpush1.msra.mxu0 0.0
        %423 = vmatprep.subr.mxu0 0.0
        %424 = vmatpush1.msra.mxu0 0.0
        %425 = vmatprep.subr.mxu0 0.0
        %426 = vmatpush1.msra.mxu0 0.0
        %427 = vmatprep.subr.mxu0 0.0
        %428 = vmatpush1.msra.mxu0 0.0
        %429 = vmatprep.subr.mxu0 0.0
        %430 = vmatpush1.msra.mxu0 0.0
        %431 = vmatprep.subr.mxu0 0.0
        %432 = vmatpush1.msra.mxu0 0.0
        %433 = vmatprep.subr.mxu0 0.0
        %434 = vmatpush1.msra.mxu0 0.0
        %435 = vmatprep.subr.mxu0 0.0
        %436 = vmatpush1.msra.mxu0 %v243
        %437 = vmatprep.subr.mxu0 0.0
        %438 = vmatpush1.msra.mxu0 %v242
        %439 = vmatprep.subr.mxu0 0.0
        %440 = vmatpush1.msra.mxu0 %v241
        %441 = vmatprep.subr.mxu0 0.0
        %442 = vmatpush1.msra.mxu0 %v240
        %443 = vmatprep.subr.mxu0 0.0
        %444 = vmatpush1.msra.mxu0 %v239
        %445 = vmatprep.subr.mxu0 0.0
        %446 = vmatpush1.msra.mxu0 %v238
        %447 = vmatprep.subr.mxu0 0.0
        %448 = vmatpush1.msra.mxu0 %v237
        %449 = vmatprep.subr.mxu0 0.0
        %450 = vmatpush2.msra.mxu0 0.0
        %451 = vmatprep.subr.mxu0 0.0
        %452 = vmatpush2.msra.mxu0 0.0
        %453 = vmatprep.subr.mxu0 0.0
        %454 = vmatpush2.msra.mxu0 0.0
        %455 = vmatprep.subr.mxu0 0.0
        %456 = vmatpush2.msra.mxu0 0.0
        %457 = vmatprep.subr.mxu0 0.0
        %458 = vmatpush2.msra.mxu0 0.0
        %459 = vmatprep.subr.mxu0 0.0
        %460 = vmatpush2.msra.mxu0 0.0
        %461 = vmatprep.subr.mxu0 0.0
        %462 = vmatpush2.msra.mxu0 0.0
        %463 = vmatprep.subr.mxu0 0.0
        %464 = vmatpush2.msra.mxu0 0.0
        %465 = vmatprep.subr.mxu0 0.0
        %466 = vmatpush2.msra.mxu0 0.0
        %467 = vmatprep.subr.mxu0 0.0
        %468 = vmatpush2.msra.mxu0 0.0
        %469 = vmatprep.subr.mxu0 0.0
        %470 = vmatpush2.msra.mxu0 0.0
        %471 = vmatprep.subr.mxu0 0.0
        %472 = vmatpush2.msra.mxu0 0.0
        %473 = vmatprep.subr.mxu0 0.0
        %474 = vmatpush2.msra.mxu0 0.0
        %475 = vmatprep.subr.mxu0 0.0
        %476 = vmatpush2.msra.mxu0 0.0
        %477 = vmatprep.subr.mxu0 0.0
        %478 = vmatpush2.msra.mxu0 0.0
        %479 = vmatprep.subr.mxu0 0.0
        %480 = vmatpush2.msra.mxu0 0.0
        %481 = vmatprep.mubr.f32.mxu0 0.0
        %482 = vmatmul.mubr.f32.gmra.mxu0 %v415
        %v483 = vpop.f32.mrf.mxu0
        %v484 = vadd.f32 0.0, %v483
        %v485 = vpop.f32.mrf.mxu0
        %486 = vdwg.mxu0
        %487 = vset.pattern.permute.xlu0 3
        %488 = vperm.xlu0 %487, %v248
        %v489 = vpop.permute.xlu0 %488
        %vm490 = vcmp.eq.s32.totalorder %v489, %v247
        %v491 = vsel %vm490, 1, 0
        %v492 = vcvt.s32.f32 %v491
        %v494 = vsel %vm255, %v492, 0
        %496 = vmatprep.subr.mxu0 0.0
        %497 = vmatpush1.msra.mxu0 0.0
        %498 = vmatprep.subr.mxu0 0.0
        %499 = vmatpush1.msra.mxu0 0.0
        %500 = vmatprep.subr.mxu0 0.0
        %501 = vmatpush1.msra.mxu0 0.0
        %502 = vmatprep.subr.mxu0 0.0
        %503 = vmatpush1.msra.mxu0 0.0
        %504 = vmatprep.subr.mxu0 0.0
        %505 = vmatpush1.msra.mxu0 0.0
        %506 = vmatprep.subr.mxu0 0.0
        %507 = vmatpush1.msra.mxu0 0.0
        %508 = vmatprep.subr.mxu0 0.0
        %509 = vmatpush1.msra.mxu0 0.0
        %510 = vmatprep.subr.mxu0 0.0
        %511 = vmatpush1.msra.mxu0 0.0
        %512 = vmatprep.subr.mxu0 0.0
        %513 = vmatpush1.msra.mxu0 0.0
        %514 = vmatprep.subr.mxu0 0.0
        %515 = vmatpush1.msra.mxu0 %v243
        %516 = vmatprep.subr.mxu0 0.0
        %517 = vmatpush1.msra.mxu0 %v242
        %518 = vmatprep.subr.mxu0 0.0
        %519 = vmatpush1.msra.mxu0 %v241
        %520 = vmatprep.subr.mxu0 0.0
        %521 = vmatpush1.msra.mxu0 %v240
        %522 = vmatprep.subr.mxu0 0.0
        %523 = vmatpush1.msra.mxu0 %v239
        %524 = vmatprep.subr.mxu0 0.0
        %525 = vmatpush1.msra.mxu0 %v238
        %526 = vmatprep.subr.mxu0 0.0
        %527 = vmatpush1.msra.mxu0 %v237
        %528 = vmatprep.subr.mxu0 0.0
        %529 = vmatpush2.msra.mxu0 0.0
        %530 = vmatprep.subr.mxu0 0.0
        %531 = vmatpush2.msra.mxu0 0.0
        %532 = vmatprep.subr.mxu0 0.0
        %533 = vmatpush2.msra.mxu0 0.0
        %534 = vmatprep.subr.mxu0 0.0
        %535 = vmatpush2.msra.mxu0 0.0
        %536 = vmatprep.subr.mxu0 0.0
        %537 = vmatpush2.msra.mxu0 0.0
        %538 = vmatprep.subr.mxu0 0.0
        %539 = vmatpush2.msra.mxu0 0.0
        %540 = vmatprep.subr.mxu0 0.0
        %541 = vmatpush2.msra.mxu0 0.0
        %542 = vmatprep.subr.mxu0 0.0
        %543 = vmatpush2.msra.mxu0 0.0
        %544 = vmatprep.subr.mxu0 0.0
        %545 = vmatpush2.msra.mxu0 0.0
        %546 = vmatprep.subr.mxu0 0.0
        %547 = vmatpush2.msra.mxu0 0.0
        %548 = vmatprep.subr.mxu0 0.0
        %549 = vmatpush2.msra.mxu0 0.0
        %550 = vmatprep.subr.mxu0 0.0
        %551 = vmatpush2.msra.mxu0 0.0
        %552 = vmatprep.subr.mxu0 0.0
        %553 = vmatpush2.msra.mxu0 0.0
        %554 = vmatprep.subr.mxu0 0.0
        %555 = vmatpush2.msra.mxu0 0.0
        %556 = vmatprep.subr.mxu0 0.0
        %557 = vmatpush2.msra.mxu0 0.0
        %558 = vmatprep.subr.mxu0 0.0
        %559 = vmatpush2.msra.mxu0 0.0
        %560 = vmatprep.mubr.f32.mxu0 0.0
        %561 = vmatmul.mubr.f32.gmra.mxu0 %v494
        %v562 = vpop.f32.mrf.mxu0
        %v563 = vadd.f32 0.0, %v562
        %v564 = vpop.f32.mrf.mxu0
        %565 = vdwg.mxu0
        %566 = vset.pattern.permute.xlu0 4
        %567 = vperm.xlu0 %566, %v248
        %v568 = vpop.permute.xlu0 %567
        %vm569 = vcmp.eq.s32.totalorder %v568, %v247
        %v570 = vsel %vm569, 1, 0
        %v571 = vcvt.s32.f32 %v570
        %vm572 = vcmask 130048
        %v574 = vsel %vm572, %v571, 0
        %576 = vmatprep.subr.mxu0 0.0
        %577 = vmatpush1.msra.mxu0 0.0
        %578 = vmatprep.subr.mxu0 0.0
        %579 = vmatpush1.msra.mxu0 0.0
        %580 = vmatprep.subr.mxu0 0.0
        %581 = vmatpush1.msra.mxu0 0.0
        %582 = vmatprep.subr.mxu0 0.0
        %583 = vmatpush1.msra.mxu0 0.0
        %584 = vmatprep.subr.mxu0 0.0
        %585 = vmatpush1.msra.mxu0 0.0
        %586 = vmatprep.subr.mxu0 0.0
        %587 = vmatpush1.msra.mxu0 0.0
        %588 = vmatprep.subr.mxu0 0.0
        %589 = vmatpush1.msra.mxu0 0.0
        %590 = vmatprep.subr.mxu0 0.0
        %591 = vmatpush1.msra.mxu0 0.0
        %592 = vmatprep.subr.mxu0 0.0
        %593 = vmatpush1.msra.mxu0 0.0
        %594 = vmatprep.subr.mxu0 0.0
        %595 = vmatpush1.msra.mxu0 0.0
        %596 = vmatprep.subr.mxu0 0.0
        %597 = vmatpush1.msra.mxu0 0.0
        %598 = vmatprep.subr.mxu0 0.0
        %599 = vmatpush1.msra.mxu0 0.0
        %600 = vmatprep.subr.mxu0 0.0
        %601 = vmatpush1.msra.mxu0 0.0
        %602 = vmatprep.subr.mxu0 0.0
        %603 = vmatpush1.msra.mxu0 0.0
        %604 = vmatprep.subr.mxu0 0.0
        %605 = vmatpush1.msra.mxu0 %v245
        %606 = vmatprep.subr.mxu0 0.0
        %607 = vmatpush1.msra.mxu0 %v244
        %608 = vmatprep.subr.mxu0 0.0
        %609 = vmatpush2.msra.mxu0 0.0
        %610 = vmatprep.subr.mxu0 0.0
        %611 = vmatpush2.msra.mxu0 0.0
        %612 = vmatprep.subr.mxu0 0.0
        %613 = vmatpush2.msra.mxu0 0.0
        %614 = vmatprep.subr.mxu0 0.0
        %615 = vmatpush2.msra.mxu0 0.0
        %616 = vmatprep.subr.mxu0 0.0
        %617 = vmatpush2.msra.mxu0 0.0
        %618 = vmatprep.subr.mxu0 0.0
        %619 = vmatpush2.msra.mxu0 0.0
        %620 = vmatprep.subr.mxu0 0.0
        %621 = vmatpush2.msra.mxu0 0.0
        %622 = vmatprep.subr.mxu0 0.0
        %623 = vmatpush2.msra.mxu0 0.0
        %624 = vmatprep.subr.mxu0 0.0
        %625 = vmatpush2.msra.mxu0 0.0
        %626 = vmatprep.subr.mxu0 0.0
        %627 = vmatpush2.msra.mxu0 0.0
        %628 = vmatprep.subr.mxu0 0.0
        %629 = vmatpush2.msra.mxu0 0.0
        %630 = vmatprep.subr.mxu0 0.0
        %631 = vmatpush2.msra.mxu0 0.0
        %632 = vmatprep.subr.mxu0 0.0
        %633 = vmatpush2.msra.mxu0 0.0
        %634 = vmatprep.subr.mxu0 0.0
        %635 = vmatpush2.msra.mxu0 0.0
        %636 = vmatprep.subr.mxu0 0.0
        %637 = vmatpush2.msra.mxu0 0.0
        %638 = vmatprep.subr.mxu0 0.0
        %639 = vmatpush2.msra.mxu0 0.0
        %640 = vmatprep.mubr.f32.mxu0 0.0
        %641 = vmatmul.mubr.f32.gmra.mxu0 %v574
        %v642 = vpop.f32.mrf.mxu0
        %v643 = vadd.f32 0.0, %v642
        %v644 = vpop.f32.mrf.mxu0
        %645 = vdwg.mxu0
        %647 = vrot.lane.b32.xlu0 %v326, 96
        %v648 = vpop.permute.xlu0 %647
        %v650 = vmul.f32 %v326, %v648
        %vm651 = vcmask 261120
        %v652 = vsel %vm651, %v650, 0.0
        %653 = vadd.xlane.f32.xlu0 %v652
        %v654 = vpop.xlane.xlu0 %653
        %v655 = vmul.f32 %v654, %v643
        %657 = vrot.lane.b32.xlu0 %v655, 96
        %v658 = vpop.permute.xlu0 %657
        %v660 = vadd.f32 %v326, %v658
        %v661 = vmul.f32 %v660, %v660
        %v662 = vsel %vm651, %v661, 0.0
        %663 = vadd.xlane.f32.xlu0 %v662
        %v664 = vpop.xlane.xlu0 %663
        %v665 = vmax.f32 %v664, 1e-24
        %v666 = vrsqrt.pop %v665
        %v667 = vmul.f32 %v660, %v666
        %v668 = vadd.f32 %v667, %v643
        %670 = vrot.lane.b32.xlu0 %v405, 96
        %v671 = vpop.permute.xlu0 %670
        %v673 = vmul.f32 %v405, %v671
        %v674 = vsel %vm651, %v673, 0.0
        %675 = vadd.xlane.f32.xlu0 %v674
        %v676 = vpop.xlane.xlu0 %675
        %v677 = vmul.f32 %v676, %v643
        %679 = vrot.lane.b32.xlu0 %v677, 96
        %v680 = vpop.permute.xlu0 %679
        %v682 = vadd.f32 %v405, %v680
        %v683 = vmul.f32 %v682, %v682
        %v684 = vsel %vm651, %v683, 0.0
        %685 = vadd.xlane.f32.xlu0 %v684
        %v686 = vpop.xlane.xlu0 %685
        %v687 = vmax.f32 %v686, 1e-24
        %v688 = vrsqrt.pop %v687
        %v689 = vmul.f32 %v682, %v688
        %v690 = vsub.f32 %v668, %v689
        %v691 = vmul.f32 %v690, %v690
        %v692 = vsel %vm651, %v691, 0.0
        %693 = vadd.xlane.f32.xlu0 %v692
        %v694 = vpop.xlane.xlu0 %693
        %v695 = vrsqrt.pop %v694
        %v696 = vmul.f32 %v694, %v695
        %vm697 = vcmp.eq.f32.partialorder %v694, inf
        %v698 = vsel %vm697, %v694, %v696
        %vm699 = vcmp.eq.f32.partialorder %v694, 0.0
        %v700 = vand.u32 %v694, 2147483648
        %v701 = vsel %vm699, %v700, %v698
        %703 = vrot.lane.b32.xlu0 %v484, 96
        %v704 = vpop.permute.xlu0 %703
        %v706 = vmul.f32 %v484, %v704
        %v707 = vsel %vm651, %v706, 0.0
        %708 = vadd.xlane.f32.xlu0 %v707
        %v709 = vpop.xlane.xlu0 %708
        %v710 = vmul.f32 %v709, %v643
        %712 = vrot.lane.b32.xlu0 %v710, 96
        %v713 = vpop.permute.xlu0 %712
        %v715 = vadd.f32 %v484, %v713
        %v716 = vmul.f32 %v715, %v715
        %v717 = vsel %vm651, %v716, 0.0
        %718 = vadd.xlane.f32.xlu0 %v717
        %v719 = vpop.xlane.xlu0 %718
        %v720 = vmax.f32 %v719, 1e-24
        %v721 = vrsqrt.pop %v720
        %v722 = vmul.f32 %v715, %v721
        %v723 = vadd.f32 %v722, %v643
        %725 = vrot.lane.b32.xlu0 %v563, 96
        %v726 = vpop.permute.xlu0 %725
        %v728 = vmul.f32 %v563, %v726
        %v729 = vsel %vm651, %v728, 0.0
        %730 = vadd.xlane.f32.xlu0 %v729
        %v731 = vpop.xlane.xlu0 %730
        %v732 = vmul.f32 %v731, %v643
        %734 = vrot.lane.b32.xlu0 %v732, 96
        %v735 = vpop.permute.xlu0 %734
        %v737 = vadd.f32 %v563, %v735
        %v738 = vmul.f32 %v737, %v737
        %v739 = vsel %vm651, %v738, 0.0
        %740 = vadd.xlane.f32.xlu0 %v739
        %v741 = vpop.xlane.xlu0 %740
        %v742 = vmax.f32 %v741, 1e-24
        %v743 = vrsqrt.pop %v742
        %v744 = vmul.f32 %v737, %v743
        %v745 = vsub.f32 %v723, %v744
        %v746 = vmul.f32 %v745, %v745
        %v747 = vsel %vm651, %v746, 0.0
        %748 = vadd.xlane.f32.xlu0 %v747
        %v749 = vpop.xlane.xlu0 %748
        %v750 = vrsqrt.pop %v749
        %v751 = vmul.f32 %v749, %v750
        %vm752 = vcmp.eq.f32.partialorder %v749, inf
        %v753 = vsel %vm752, %v749, %v751
        %vm754 = vcmp.eq.f32.partialorder %v749, 0.0
        %v755 = vand.u32 %v749, 2147483648
        %v756 = vsel %vm754, %v755, %v753
        %s757 = sld [smem:[#allocation3]]
        %s758 = sld [smem:[#allocation2]]
        %v759 = vsub.f32 %v701, %v756
        %v760 = vstv %s757
        %v761 = vadd.f32 %v759, %v760
        %v762 = vmax.f32 %v761, 0.0
        %s763 = smul.u32 %s22, 8
        %v764 = vlaneseq
        %v765 = vshrl.u32 %v764, 7
        %v766 = vstv %s763
        %v767 = vadd.s32 %v766, %v765
        %v768 = vstv %s758
        %vm769 = vcmp.lt.s32.totalorder %v767, %v768
        %v770 = vsel %vm769, %v762, 0.0
        %vm771 = vcmask 7168
        %v772 = vsel %vm771, %v770, 0.0
        %773 = vadd.xlane.f32.xlu0 %v772
        %v774 = vpop.xlane.xlu0 %773
        %v775 = vrot.slane %v774, 4
        %v776 = vadd.f32 %v774, %v775
        %v777 = vrot.slane %v776, 2
        %v778 = vadd.f32 %v776, %v777
        %v779 = vrot.slane %v778, 1
        %v780 = vadd.f32 %v778, %v779
        %s781 = vtos %v780
        %v782 = vstv %s781
        %v783 = vadd.f32 %v782, 0.0
        %784 = vst [vmem:[%s232] sm:$0xff] %v783
        %s785 = sand.u32 %s140, 1
        %s786 = scalar_lea.sflag [#allocation6], %s785
        %s787 = sand.u32 %s140, 1
        %s788 = smul.addr %s787, 8
        %s789 = scalar_lea.vmem [#allocation7], %s788
        // Predicated region
        $region45: #{tpu_custom_call.1} parent=39 // pred_check
          %p790 = pneg %p150
        $region46: #{tpu_custom_call.1} parent=39 // pred_check_branch
          %792 = sbr.rel (%p790) target = $region48
        $region47: #{tpu_custom_call.1} parent=39 // pred_region
          %s794 = ssub.s32 128, 128
          %795 = vsyncadd %s786, %s794
          %s796 = smul.addr %s22, 128
          %s797 = scalar_lea.hbm %s5, %s796
          %s799 = sshll.u32 %s789, 4
          %s800 = int_to_ptr.vmem [resolvable:$true] %s799
          %802 = dma.vmem_to_hbm [thread:$0]  %s800, 128, %s797, %s786
        $region48: #{tpu_custom_call.1} parent=39 // pred_fallthru
          _
      $region40: #{tpu_custom_call.1} parent=5 // pred_fallthru
        _
      %p803 = scmp.le.s32.totalorder 2, %s17
      // Predicated region
      $region49: #{tpu_custom_call.1} parent=5 // pred_check
        %p804 = pneg %p803
      $region50: #{tpu_custom_call.1} parent=5 // pred_check_branch
        %806 = sbr.rel (%p804) target = $region52
      $region51: #{tpu_custom_call.1} parent=5 // pred_region
        %s807 = ssub.s32 %s17, 2
        // Predicated region
        $region53: #{tpu_custom_call.1} parent=51 // pred_check
          %p808 = pneg %p156
        $region54: #{tpu_custom_call.1} parent=51 // pred_check_branch
          %810 = sbr.rel (%p808) target = $region56
        $region55: #{tpu_custom_call.1} parent=51 // pred_region
          %s811 = sand.u32 %s141, 1
          %s812 = scalar_lea.sflag [#allocation6], %s811
          %s813 = sand.u32 %s141, 1
          %s814 = smul.addr %s813, 8
          %s815 = scalar_lea.vmem [#allocation7], %s814
          %816 = dma.done %s812, 128
        $region56: #{tpu_custom_call.1} parent=51 // pred_fallthru
          _
      $region52: #{tpu_custom_call.1} parent=5 // pred_fallthru
        _
    $region6: #{tpu_custom_call.1} parent=1 // loop_footer
      %s21 = sadd.s32 1, %s17
    $region7: #{tpu_custom_call.1} parent=1 // loop_footer_branch
      %16 = sbr.rel target = $region3
    $region8: #{tpu_custom_call.1} parent=1 // loop_exit
      _
    %817 = vsyncpa [#allocation5], 1
    %s818 = scalar_lea.sflag [#allocation5], 1
    %819 = vsyncpa %s818, 1
    %820 = vsyncpa [#allocation6], 1
    %s821 = scalar_lea.sflag [#allocation6], 1
    %822 = vsyncpa %s821, 1

</llo_original>
